<compile_context>
chip_gen: v7x
topology: tpu7x:2x2x1
jax: 0.10.0
libtpu: 0.0.40
codegen_flags: <defaults>
</compile_context>

<pallas_src>
import functools

import jax
import jax.numpy as jnp
from jax import lax
from jax.experimental import pallas as pl
from jax.experimental.pallas import tpu as pltpu

_EPS = 1e-8  # matches torch.nn.functional.cosine_similarity default eps

_VMEM_LIMIT_BYTES = 48 * 1024 * 1024   # < 64 MiB physical on v7x; plenty of headroom on v5e/v6e
_VMEM_TILE_BUDGET = 40 * 1024 * 1024   # budget used to size the patch tile


def _choose_patch_tile(P, B, D, in_itemsize, budget_bytes):
    """Pick how many patches to process per grid step from a VMEM budget."""
    # Fixed residents: z_avg (double-buffered input dtype + f32 copy), inv_n2, accumulator.
    fixed = B * D * (2 * in_itemsize + 4) + 2 * D * 4
    avail = max(budget_bytes - fixed, 0)
    # Conservative per-patch working set: double-buffered input tile + ~3x f32 temporaries.
    per_patch = B * D * (2 * in_itemsize + 12)
    pt = max(1, avail // max(per_patch, 1))
    return int(min(P, pt))


def _sim_loss_kernel(z_ref, zavg_ref, inv_n2_ref, neg_ref, pos_ref, acc_ref,
                     *, total_patches, inv_pd, needs_mask):
    """Grid axis 0 iterates over patch tiles (sequential, 'arbitrary').

    acc_ref is a VMEM (1, D) f32 accumulator of per-lane cosine sums; the single
    cross-lane reduce and the SMEM scalar writes happen only in the last step.
    """
    i = pl.program_id(0)
    n_tiles = pl.num_programs(0)

    @pl.when(i == 0)
    def _():
        acc_ref[...] = jnp.zeros_like(acc_ref)

    z = z_ref[...].astype(jnp.float32)        # (Pt, B, D) — upcast in-kernel, DMA stays narrow
    za = zavg_ref[...].astype(jnp.float32)    # (B, D)     — grid-resident
    inv_n2 = inv_n2_ref[...]                  # (1, D)     — hoisted 1/max(||z_avg||, eps)

    # cosine similarity along the batch axis for all Pt patches at once
    num = jnp.sum(z * za[None, :, :], axis=1)                       # (Pt, D)
    ss_z = jnp.sum(z * z, axis=1)                                   # (Pt, D)
    inv_n1 = lax.rsqrt(jnp.maximum(ss_z, _EPS * _EPS))              # == 1/max(||z_i||, eps)
    cos = num * inv_n1 * inv_n2                                     # (Pt, D)

    if needs_mask:
        # Last tile may read past the real patch count; zero out padded rows.
        pid = i * cos.shape[0] + lax.broadcasted_iota(jnp.int32, cos.shape, 0)
        cos = jnp.where(pid < total_patches, cos, 0.0)

    acc_ref[...] += jnp.sum(cos, axis=0, keepdims=True)             # (1, D)

    @pl.when(i == n_tiles - 1)
    def _():
        z_sim = jnp.sum(acc_ref[...]) * inv_pd
        neg_ref[0, 0] = -z_sim
        pos_ref[0, 0] = z_sim


def similarity_loss_1(z_list, z_avg, *, patch_tile=None):
    """Pallas implementation of Similarity_Loss_1.forward.

    `z_list` may be a list/tuple of (B, D) arrays or an already-stacked (P, B, D)
    array (preferred — avoids an extra HBM read+write for the stack).
    Returns (-z_sim, z_sim_detached).
    """
    if isinstance(z_list, (list, tuple)):
        z = jnp.stack(list(z_list), axis=0)
    else:
        z = z_list
    P, B, D = z.shape

    # Hoist the z_avg norm: computed once (tiny (B, D) op), passed in as a resident input.
    za32 = z_avg.astype(jnp.float32)
    inv_n2 = lax.rsqrt(
        jnp.maximum(jnp.sum(za32 * za32, axis=0, keepdims=True), _EPS * _EPS))  # (1, D)

    if patch_tile is None:
        patch_tile = _choose_patch_tile(P, B, D, z.dtype.itemsize, _VMEM_TILE_BUDGET)
    patch_tile = int(max(1, min(P, patch_tile)))
    n_tiles = pl.cdiv(P, patch_tile)
    needs_mask = (P % patch_tile) != 0

    kernel = functools.partial(
        _sim_loss_kernel,
        total_patches=P,
        inv_pd=1.0 / (P * D),
        needs_mask=needs_mask,
    )

    neg, pos = pl.pallas_call(
        kernel,
        out_shape=(
            jax.ShapeDtypeStruct((1, 1), jnp.float32),
            jax.ShapeDtypeStruct((1, 1), jnp.float32),
        ),
        grid_spec=pltpu.PrefetchScalarGridSpec(
            num_scalar_prefetch=0,
            grid=(n_tiles,),
            in_specs=[
                pl.BlockSpec((patch_tile, B, D), lambda i: (i, 0, 0)),  # Pt patches / step
                pl.BlockSpec((B, D), lambda i: (0, 0)),                 # z_avg resident
                pl.BlockSpec((1, D), lambda i: (0, 0)),                 # inv ||z_avg|| resident
            ],
            out_specs=(
                pl.BlockSpec(memory_space=pltpu.MemorySpace.SMEM),
                pl.BlockSpec(memory_space=pltpu.MemorySpace.SMEM),
            ),
            scratch_shapes=[pltpu.VMEM((1, D), jnp.float32)],
        ),
        compiler_params=pltpu.CompilerParams(
            dimension_semantics=("arbitrary",),   # sequential: VMEM accumulator across tiles
            vmem_limit_bytes=_VMEM_LIMIT_BYTES,
        ),
    )(z, z_avg, inv_n2)

    return neg[0, 0], jax.lax.stop_gradient(pos[0, 0])


def _reference(z_list, z_avg):
    """Pure-JAX reference mirroring the PyTorch code."""
    if isinstance(z_list, (list, tuple)):
        z = jnp.stack(list(z_list), axis=0)
    else:
        z = z_list
    z = z.astype(jnp.float32)
    za = z_avg.astype(jnp.float32)
    num = jnp.sum(z * za[None], axis=1)                         # (P, D)
    n1 = jnp.sqrt(jnp.sum(z * z, axis=1))                       # (P, D)
    n2 = jnp.sqrt(jnp.sum(za * za, axis=0))                     # (D,)
    cos = num / (jnp.maximum(n1, _EPS) * jnp.maximum(n2, _EPS)[None])
    z_sim = jnp.mean(cos, axis=1).sum() / z.shape[0]
    return -z_sim, z_sim


if __name__ == "__main__":
    key = jax.random.PRNGKey(0)
    num_patch, batch, dim = 20, 8, 128
    k_z, k_avg = jax.random.split(key)
    z = jax.random.normal(k_z, (num_patch, batch, dim), dtype=jnp.float32)
    z_avg = jax.random.normal(k_avg, (batch, dim), dtype=jnp.float32)

    # Exercise the multi-patch tiling + remainder masking path (20 = 8 + 8 + 4).
    neg_sim, sim_out = similarity_loss_1(z, z_avg, patch_tile=8)
    jax.block_until_ready((neg_sim, sim_out))

    ref_neg, ref_pos = _reference(z, z_avg)
    assert jnp.allclose(neg_sim, ref_neg, atol=1e-5), (neg_sim, ref_neg)
    assert jnp.allclose(sim_out, ref_pos, atol=1e-5), (sim_out, ref_pos)

    # Also exercise the list-input API and the automatic tile-size choice.
    z_list = [z[i] for i in range(num_patch)]
    neg2, pos2 = similarity_loss_1(z_list, z_avg)
    jax.block_until_ready((neg2, pos2))
    assert jnp.allclose(neg2, ref_neg, atol=1e-5), (neg2, ref_neg)

    # bf16 inputs: DMA stays bf16 (half the HBM traffic), compute is f32 in-kernel.
    z_bf = z.astype(jnp.bfloat16)
    za_bf = z_avg.astype(jnp.bfloat16)
    neg_bf, pos_bf = similarity_loss_1(z_bf, za_bf, patch_tile=8)
    jax.block_until_ready((neg_bf, pos_bf))
    ref_neg_bf, _ = _reference(z_bf, za_bf)
    assert jnp.allclose(neg_bf, ref_neg_bf, atol=5e-2), (neg_bf, ref_neg_bf)

    print("KERNEL_OK")
</pallas_src>

<mosaic_0001>
module attributes {stable_mosaic.version = 11 : i64} {
  func.func @_sim_loss_kernel(%arg0: i32, %arg1: memref<8x8x128xf32, #tpu.memory_space<vmem>>, %arg2: memref<8x128xf32, #tpu.memory_space<vmem>>, %arg3: memref<1x128xf32, #tpu.memory_space<vmem>>, %arg4: memref<1x1xf32, #tpu.memory_space<smem>>, %arg5: memref<1x1xf32, #tpu.memory_space<smem>>, %arg6: memref<1x128xf32, #tpu.memory_space<vmem>>) attributes {dimension_semantics = [#tpu.dimension_semantics<arbitrary>], iteration_bounds = array<i64: 3>, scalar_prefetch = 0 : i64, scratch_operands = 1 : i64, tpu.core_type = #tpu.core_type<tc>, window_params = [{transform_indices = @transform_0, window_bounds = array<i64: 8, 8, 128>}, {pipeline_mode = #tpu.pipeline_mode<synchronous>, transform_indices = @transform_1, window_bounds = array<i64: 8, 128>}, {pipeline_mode = #tpu.pipeline_mode<synchronous>, transform_indices = @transform_2, window_bounds = array<i64: 1, 128>}, {transform_indices = @transform_3, window_bounds = array<i64: 1, 1>}, {transform_indices = @transform_4, window_bounds = array<i64: 1, 1>}]} {
    %c0_i32 = arith.constant 0 : i32
    %0 = arith.cmpi eq, %arg0, %c0_i32 : i32
    %1 = arith.extui %0 : i1 to i32
    %c0_i32_0 = arith.constant 0 : i32
    %2 = arith.cmpi ne, %1, %c0_i32_0 : i32
    scf.if %2 {
      %cst_16 = arith.constant 0.000000e+00 : f32
      %34 = vector.broadcast %cst_16 : f32 to vector<1x128xf32>
      %c0_17 = arith.constant 0 : index
      %c0_18 = arith.constant 0 : index
      %35 = vector.load %arg6[%c0_17, %c0_18] : memref<1x128xf32, #tpu.memory_space<vmem>>, vector<1x128xf32>
      tpu.vector_store %arg6[%c0_17, %c0_18], %34 {strides = array<i32>} : memref<1x128xf32, #tpu.memory_space<vmem>>, vector<1x128xf32>,
    } else {
    }
    %c0 = arith.constant 0 : index
    %c0_1 = arith.constant 0 : index
    %c0_2 = arith.constant 0 : index
    %3 = vector.load %arg1[%c0, %c0_1, %c0_2] : memref<8x8x128xf32, #tpu.memory_space<vmem>>, vector<8x8x128xf32>
    %c0_3 = arith.constant 0 : index
    %c0_4 = arith.constant 0 : index
    %4 = vector.load %arg2[%c0_3, %c0_4] : memref<8x128xf32, #tpu.memory_space<vmem>>, vector<8x128xf32>
    %c0_5 = arith.constant 0 : index
    %c0_6 = arith.constant 0 : index
    %5 = vector.load %arg3[%c0_5, %c0_6] : memref<1x128xf32, #tpu.memory_space<vmem>>, vector<1x128xf32>
    %6 = vector.shape_cast %4 : vector<8x128xf32> to vector<1x8x128xf32>
    %7 = vector.broadcast %6 : vector<1x8x128xf32> to vector<8x8x128xf32>
    %8 = arith.mulf %3, %7 : vector<8x8x128xf32>
    %cst = arith.constant dense<0.000000e+00> : vector<8x128xf32>
    %9 = vector.multi_reduction <add>, %8, %cst [1] : vector<8x8x128xf32> to vector<8x128xf32>
    %10 = arith.mulf %3, %3 : vector<8x8x128xf32>
    %cst_7 = arith.constant dense<0.000000e+00> : vector<8x128xf32>
    %11 = vector.multi_reduction <add>, %10, %cst_7 [1] : vector<8x8x128xf32> to vector<8x128xf32>
    %cst_8 = arith.constant 1.000000e-16 : f32
    %12 = vector.broadcast %cst_8 : f32 to vector<8x128xf32>
    %13 = arith.maximumf %11, %12 : vector<8x128xf32>
    %14 = math.rsqrt %13 : vector<8x128xf32>
    %15 = arith.mulf %9, %14 : vector<8x128xf32>
    %16 = vector.broadcast %5 : vector<1x128xf32> to vector<8x128xf32>
    %17 = arith.mulf %15, %16 : vector<8x128xf32>
    %c8_i32 = arith.constant 8 : i32
    %18 = arith.muli %arg0, %c8_i32 : i32
    %19 = tpu.iota {dimensions = array<i32: 0>} : vector<8x128xi32>
    %20 = vector.broadcast %18 : i32 to vector<8x128xi32>
    %21 = arith.addi %20, %19 : vector<8x128xi32>
    %c20_i32 = arith.constant 20 : i32
    %22 = vector.broadcast %c20_i32 : i32 to vector<8x128xi32>
    %23 = arith.cmpi slt, %21, %22 : vector<8x128xi32>
    %cst_9 = arith.constant 0.000000e+00 : f32
    %24 = vector.broadcast %cst_9 : f32 to vector<8x128xf32>
    %25 = arith.select %23, %17, %24 : vector<8x128xi1>, vector<8x128xf32>
    %c0_10 = arith.constant 0 : index
    %c0_11 = arith.constant 0 : index
    %26 = vector.load %arg6[%c0_10, %c0_11] : memref<1x128xf32, #tpu.memory_space<vmem>>, vector<1x128xf32>
    %cst_12 = arith.constant dense<0.000000e+00> : vector<128xf32>
    %27 = vector.multi_reduction <add>, %25, %cst_12 [0] : vector<8x128xf32> to vector<128xf32>
    %28 = vector.shape_cast %27 : vector<128xf32> to vector<1x128xf32>
    %29 = arith.addf %26, %28 : vector<1x128xf32>
    %c0_13 = arith.constant 0 : index
    %c0_14 = arith.constant 0 : index
    %30 = vector.load %arg6[%c0_13, %c0_14] : memref<1x128xf32, #tpu.memory_space<vmem>>, vector<1x128xf32>
    tpu.vector_store %arg6[%c0_13, %c0_14], %29 {strides = array<i32>} : memref<1x128xf32, #tpu.memory_space<vmem>>, vector<1x128xf32>,
    %c2_i32 = arith.constant 2 : i32
    %31 = arith.cmpi eq, %arg0, %c2_i32 : i32
    %32 = arith.extui %31 : i1 to i32
    %c0_i32_15 = arith.constant 0 : i32
    %33 = arith.cmpi ne, %32, %c0_i32_15 : i32
    scf.if %33 {
      %c0_16 = arith.constant 0 : index
      %c0_17 = arith.constant 0 : index
      %34 = vector.load %arg6[%c0_16, %c0_17] : memref<1x128xf32, #tpu.memory_space<vmem>>, vector<1x128xf32>
      %35 = vector.shape_cast %34 : vector<1x128xf32> to vector<1x1x128xf32>
      %cst_18 = arith.constant dense<0.000000e+00> : vector<1xf32>
      %36 = vector.multi_reduction <add>, %35, %cst_18 [1, 2] : vector<1x1x128xf32> to vector<1xf32>
      %37 = vector.shape_cast %36 : vector<1xf32> to vector<1x1x1xf32>
      %38 = vector.extract %37[0, 0, 0] : f32 from vector<1x1x1xf32>
      %cst_19 = arith.constant 3.906250e-04 : f32
      %39 = arith.mulf %38, %cst_19 : f32
      %cst_20 = arith.constant 0.000000e+00 : f32
      %40 = arith.subf %cst_20, %39 : f32
      %c0_21 = arith.constant 0 : index
      %c0_22 = arith.constant 0 : index
      %41 = memref.load %arg4[%c0_21, %c0_22] : memref<1x1xf32, #tpu.memory_space<smem>>
      memref.store %40, %arg4[%c0_21, %c0_22] : memref<1x1xf32, #tpu.memory_space<smem>>
      %c0_23 = arith.constant 0 : index
      %c0_24 = arith.constant 0 : index
      %42 = memref.load %arg5[%c0_23, %c0_24] : memref<1x1xf32, #tpu.memory_space<smem>>
      memref.store %39, %arg5[%c0_23, %c0_24] : memref<1x1xf32, #tpu.memory_space<smem>>
    } else {
    }
    return
  }
  func.func @transform_0(%arg0: i32) -> (i32, i32, i32) {
    %c0_i32 = arith.constant 0 : i32
    %c0_i32_0 = arith.constant 0 : i32
    %c0_i32_1 = arith.constant 0 : i32
    return %arg0, %c0_i32, %c0_i32_0 : i32, i32, i32
  }
  func.func @transform_1(%arg0: i32) -> (i32, i32) {
    %c0_i32 = arith.constant 0 : i32
    %c0_i32_0 = arith.constant 0 : i32
    %c0_i32_1 = arith.constant 0 : i32
    return %c0_i32, %c0_i32_0 : i32, i32
  }
  func.func @transform_2(%arg0: i32) -> (i32, i32) {
    %c0_i32 = arith.constant 0 : i32
    %c0_i32_0 = arith.constant 0 : i32
    %c0_i32_1 = arith.constant 0 : i32
    return %c0_i32, %c0_i32_0 : i32, i32
  }
  func.func @transform_3(%arg0: i32) -> (i32, i32) {
    %c0_i32 = arith.constant 0 : i32
    %c0_i32_0 = arith.constant 0 : i32
    %c0_i32_1 = arith.constant 0 : i32
    return %c0_i32, %c0_i32_0 : i32, i32
  }
  func.func @transform_4(%arg0: i32) -> (i32, i32) {
    %c0_i32 = arith.constant 0 : i32
    %c0_i32_0 = arith.constant 0 : i32
    %c0_i32_1 = arith.constant 0 : i32
    return %c0_i32, %c0_i32_0 : i32, i32
  }
}

</mosaic_0001>

<llo_original>
// kernel: tpu_custom_call.1
$region0: #{tpu_custom_call.1}
  #allocation0 [shape = 'u32[]', space=smem, size = 0x4, offset = 0x4, fixed_abs, tag = 'smem constant byte address 0x4 - core index']
  #allocation1 [shape = 'u32[144,128]{1,0:T(1,128)}', space=vmem, size = 0x12000, scoped, tag = 'internal scratch']
  #allocation2 [shape = 'f32[1,128]{1,0:T(1,128)}', space=vmem, size = 0x200, scoped, tag = 'scratch operand']
  %s0 = inlined_call_operand.hbm [shape: f32[20,8,128], index: 0, kind: input, shape index: {}]
  %s1 = inlined_call_operand.hbm [shape: f32[8,128], index: 1, kind: input, shape index: {}]
  %s2 = inlined_call_operand.vmem [shape: f32[1,128], index: 2, kind: input, shape index: {}]
  %s3 = inlined_call_operand.hbm [shape: f32[1,1], index: 3, kind: output, shape index: {0}]
  %s4 = inlined_call_operand.hbm [shape: f32[1,1], index: 4, kind: output, shape index: {1}]
  %5 = xla_tuple %s3, %s4
  %s6 = sld [smem:[#allocation0]]
  $region69: #{tpu_custom_call.1} parent=0
    _
  %s8 = ssub.s32 1, %s6
  %s9 = scalar_select 0, %s8, %s6
  $region1: #{tpu_custom_call.1} parent=0
    #allocation3 [shape = 'u8[65536]{0}', space=vmem, size = 0x10000, scoped, tag = 'input window, operand 0']
    #allocation4 [shape = 's32[2]{0}', space=sflag, size = 0x8, scoped, tag = 'scoped memory for tpu_custom_call.1']
    #allocation5 [shape = 's32[2]{0}', space=sflag, size = 0x8, scoped, tag = 'scoped memory for tpu_custom_call.1']
    #allocation6 [shape = 'u8[4096]{0}', space=vmem, size = 0x1000, scoped, tag = 'input window, operand 1, single buffered']
    #allocation7 [shape = 's32[1]{0}', space=sflag, size = 0x4, scoped, tag = 'scoped memory for tpu_custom_call.1']
    #allocation8 [shape = 'u8[512]{0}', space=smem, size = 0x200, scoped, tag = 'output window, operand 0, single buffered']
    #allocation9 [shape = 'u8[512]{0}', space=smem, size = 0x200, scoped, tag = 'output window, operand 1, single buffered']
    #allocation10 [shape = 's32[1]{0}', space=sflag, size = 0x4, scoped, tag = 'scoped memory for tpu_custom_call.1']
    %10 = vsyncpa [#allocation4], 0
    %s11 = scalar_lea.sflag [#allocation4], 1
    %12 = vsyncpa %s11, 0
    %13 = vsyncpa [#allocation7], 0
    %14 = vsyncpa [#allocation5], 0
    %15 = vsyncpa [#allocation10], 0
    loop: start=0, step=1, limit=5
    $region2: #{tpu_custom_call.1} parent=1 // loop_pre_header
      _
    $region3: #{tpu_custom_call.1} parent=1 // loop_header
      %s17 = sphi 0, %s21
      %p18 = scmp.ge.s32.totalorder %s17, 5
      %s27 = sphi 0, %s29
      %s30 = sphi 0, %s27
      %s31 = sphi 0, %s30
      %s47 = sphi 0, %s31
      %s51 = sphi 0, %s51
      %s53 = sphi 0, %s51
      %s54 = sphi 0, %s53
      %s68 = sphi 0, %s54
      %s72 = sphi 0, %s72
      %s74 = sphi 0, %s72
      %s75 = sphi 0, %s74
      %s89 = sphi 0, %s75
      %s93 = sphi 0, %s93
      %s95 = sphi 0, %s93
      %s96 = sphi 0, %s95
      %s110 = sphi 0, %s96
      %s114 = sphi 0, %s114
      %s116 = sphi 0, %s114
      %s117 = sphi 0, %s116
      %s131 = sphi 0, %s117
    $region4: #{tpu_custom_call.1} parent=1 // loop_header_branch
      %20 = sbr.rel (%p18) target = $region8
    $region5: #{tpu_custom_call.1} parent=1 // loop_body
      %s22 = ssub.s32 %s17, 1
      %s23 = ssub.s32 %s17, 2
      %s24 = sadd.s32 %s17, 1
      %s25 = ssub.s32 %s17, %s24
      %p26 = scmp.eq.s32.totalorder %s25, 0
      %s28 = sadd.s32 %s27, 1
      %s29 = scalar_select %p26, %s27, %s28
      %p32 = pneg %p26
      %p33 = scmp.eq.s32.totalorder %s17, 2
      %p34 = por %p32, %p33
      %p35 = scmp.ne.s32.totalorder %s27, %s30
      %p36 = scmp.eq.s32.totalorder %s17, 0
      %p37 = por %p35, %p36
      %p38 = scmp.ne.s32.totalorder %s27, %s30
      %p39 = scmp.eq.s32.totalorder %s22, 2
      %p40 = por %p38, %p39
      %p41 = scmp.ne.s32.totalorder %s30, %s31
      %p42 = scmp.eq.s32.totalorder %s22, 0
      %p43 = por %p41, %p42
      %p44 = scmp.ne.s32.totalorder %s30, %s31
      %p45 = scmp.eq.s32.totalorder %s23, 2
      %p46 = por %p44, %p45
      %p48 = scmp.ne.s32.totalorder %s31, %s47
      %p49 = scmp.eq.s32.totalorder %s23, 0
      %p50 = por %p48, %p49
      %s52 = sadd.s32 %s51, 1
      %p55 = scmp.eq.s32.totalorder %s17, 2
      %p56 = scmp.ne.s32.totalorder %s51, %s53
      %p57 = scmp.eq.s32.totalorder %s17, 0
      %p58 = por %p56, %p57
      %p59 = scmp.ne.s32.totalorder %s51, %s53
      %p60 = scmp.eq.s32.totalorder %s22, 2
      %p61 = por %p59, %p60
      %p62 = scmp.ne.s32.totalorder %s53, %s54
      %p63 = scmp.eq.s32.totalorder %s22, 0
      %p64 = por %p62, %p63
      %p65 = scmp.ne.s32.totalorder %s53, %s54
      %p66 = scmp.eq.s32.totalorder %s23, 2
      %p67 = por %p65, %p66
      %p69 = scmp.ne.s32.totalorder %s54, %s68
      %p70 = scmp.eq.s32.totalorder %s23, 0
      %p71 = por %p69, %p70
      %s73 = sadd.s32 %s72, 1
      %p76 = scmp.eq.s32.totalorder %s17, 2
      %p77 = scmp.ne.s32.totalorder %s72, %s74
      %p78 = scmp.eq.s32.totalorder %s17, 0
      %p79 = por %p77, %p78
      %p80 = scmp.ne.s32.totalorder %s72, %s74
      %p81 = scmp.eq.s32.totalorder %s22, 2
      %p82 = por %p80, %p81
      %p83 = scmp.ne.s32.totalorder %s74, %s75
      %p84 = scmp.eq.s32.totalorder %s22, 0
      %p85 = por %p83, %p84
      %p86 = scmp.ne.s32.totalorder %s74, %s75
      %p87 = scmp.eq.s32.totalorder %s23, 2
      %p88 = por %p86, %p87
      %p90 = scmp.ne.s32.totalorder %s75, %s89
      %p91 = scmp.eq.s32.totalorder %s23, 0
      %p92 = por %p90, %p91
      %s94 = sadd.s32 %s93, 1
      %p97 = scmp.eq.s32.totalorder %s17, 2
      %p98 = scmp.ne.s32.totalorder %s93, %s95
      %p99 = scmp.eq.s32.totalorder %s17, 0
      %p100 = por %p98, %p99
      %p101 = scmp.ne.s32.totalorder %s93, %s95
      %p102 = scmp.eq.s32.totalorder %s22, 2
      %p103 = por %p101, %p102
      %p104 = scmp.ne.s32.totalorder %s95, %s96
      %p105 = scmp.eq.s32.totalorder %s22, 0
      %p106 = por %p104, %p105
      %p107 = scmp.ne.s32.totalorder %s95, %s96
      %p108 = scmp.eq.s32.totalorder %s23, 2
      %p109 = por %p107, %p108
      %p111 = scmp.ne.s32.totalorder %s96, %s110
      %p112 = scmp.eq.s32.totalorder %s23, 0
      %p113 = por %p111, %p112
      %s115 = sadd.s32 %s114, 1
      %p118 = scmp.eq.s32.totalorder %s17, 2
      %p119 = scmp.ne.s32.totalorder %s114, %s116
      %p120 = scmp.eq.s32.totalorder %s17, 0
      %p121 = por %p119, %p120
      %p122 = scmp.ne.s32.totalorder %s114, %s116
      %p123 = scmp.eq.s32.totalorder %s22, 2
      %p124 = por %p122, %p123
      %p125 = scmp.ne.s32.totalorder %s116, %s117
      %p126 = scmp.eq.s32.totalorder %s22, 0
      %p127 = por %p125, %p126
      %p128 = scmp.ne.s32.totalorder %s116, %s117
      %p129 = scmp.eq.s32.totalorder %s23, 2
      %p130 = por %p128, %p129
      %p132 = scmp.ne.s32.totalorder %s117, %s131
      %p133 = scmp.eq.s32.totalorder %s23, 0
      %p134 = por %p132, %p133
      %p135 = scmp.le.s32.totalorder 1, %s17
      %p136 = scmp.lt.s32.totalorder %s17, 4
      %p137 = pnand %p135, %p136
      %p138 = pneg %p137
      // Predicated region
      $region9: #{tpu_custom_call.1} parent=5 // pred_check
        _
      $region10: #{tpu_custom_call.1} parent=5 // pred_check_branch
        %140 = sbr.rel (%p137) target = $region12
      $region11: #{tpu_custom_call.1} parent=5 // pred_region
        %s141 = ssub.s32 %s17, 1
        // Predicated region
        $region13: #{tpu_custom_call.1} parent=11 // pred_check
          %p142 = pneg %p64
        $region14: #{tpu_custom_call.1} parent=11 // pred_check_branch
          %144 = sbr.rel (%p142) target = $region16
        $region15: #{tpu_custom_call.1} parent=11 // pred_region
          %s146 = ssub.s32 128, 128
          %147 = vsyncadd [#allocation7], %s146
          %s149 = sshll.u32 [#allocation6], 4
          %s150 = int_to_ptr.vmem [resolvable:$true] %s149
          %152 = dma.hbm_to_vmem [thread:$0]  %s1, 128, %s150, [#allocation7]
        $region16: #{tpu_custom_call.1} parent=11 // pred_fallthru
          _
        // Predicated region
        $region17: #{tpu_custom_call.1} parent=11 // pred_check
          %p153 = pneg %p85
        $region18: #{tpu_custom_call.1} parent=11 // pred_check_branch
          %155 = sbr.rel (%p153) target = $region20
        $region19: #{tpu_custom_call.1} parent=11 // pred_region
          _
        $region20: #{tpu_custom_call.1} parent=11 // pred_fallthru
          _
      $region12: #{tpu_custom_call.1} parent=5 // pred_fallthru
        _
      %p156 = scmp.lt.s32.totalorder %s17, 3
      // Predicated region
      $region21: #{tpu_custom_call.1} parent=5 // pred_check
        %p157 = pneg %p156
      $region22: #{tpu_custom_call.1} parent=5 // pred_check_branch
        %159 = sbr.rel (%p157) target = $region24
      $region23: #{tpu_custom_call.1} parent=5 // pred_region
        // Predicated region
        $region25: #{tpu_custom_call.1} parent=23 // pred_check
          %p160 = pneg %p37
        $region26: #{tpu_custom_call.1} parent=23 // pred_check_branch
          %162 = sbr.rel (%p160) target = $region28
        $region27: #{tpu_custom_call.1} parent=23 // pred_region
          %s163 = sand.u32 %s27, 1
          %s164 = scalar_lea.sflag [#allocation4], %s163
          %s165 = sand.u32 %s27, 1
          %s166 = smul.addr %s165, 64
          %s167 = scalar_lea.vmem [#allocation3], %s166
          %s168 = smul.u32 8, %s17
          %s169 = ssub.s32 20, %s168
          %p170 = scmp.lt.s32.totalorder %s169, 8
          %s171 = scalar_select %p170, %s169, 8
          %s172 = smul.u32 128, %s171
          %s174 = ssub.s32 1024, %s172
          %175 = vsyncadd %s164, %s174
          %p176 = scmp.ne.s32.totalorder 0, %s172
          %s177 = smul.addr %s168, 128
          %s178 = scalar_lea.hbm %s0, %s177
          %s179 = smul.u32 8, %s171
          %s180 = sshll.u32 %s167, 4
          %s181 = int_to_ptr.vmem [resolvable:$true] %s180
          %s182 = sshll.u32 %s179, 4
          %186 = dma.hbm_to_vmem [thread:$0]  (%p176), %s178, %s182, %s181, %s164, 128, 128, 8
        $region28: #{tpu_custom_call.1} parent=23 // pred_fallthru
          _
      $region24: #{tpu_custom_call.1} parent=5 // pred_fallthru
        _
      %p187 = scmp.le.s32.totalorder 1, %s17
      %p188 = scmp.lt.s32.totalorder %s17, 4
      %p189 = pnand %p187, %p188
      %p190 = pneg %p189
      // Predicated region
      $region29: #{tpu_custom_call.1} parent=5 // pred_check
        _
      $region30: #{tpu_custom_call.1} parent=5 // pred_check_branch
        %192 = sbr.rel (%p189) target = $region32
      $region31: #{tpu_custom_call.1} parent=5 // pred_region
        %s193 = ssub.s32 %s17, 1
        %s194 = sand.u32 %s30, 1
        %s195 = scalar_lea.sflag [#allocation4], %s194
        %s196 = sand.u32 %s30, 1
        %s197 = smul.addr %s196, 64
        %s198 = scalar_lea.vmem [#allocation3], %s197
        // Predicated region
        $region33: #{tpu_custom_call.1} parent=31 // pred_check
          %p199 = pneg %p43
        $region34: #{tpu_custom_call.1} parent=31 // pred_check_branch
          %201 = sbr.rel (%p199) target = $region36
        $region35: #{tpu_custom_call.1} parent=31 // pred_region
          %202 = dma.done %s195, 1024
        $region36: #{tpu_custom_call.1} parent=31 // pred_fallthru
          _
        // Predicated region
        $region37: #{tpu_custom_call.1} parent=31 // pred_check
          %p203 = pneg %p64
        $region38: #{tpu_custom_call.1} parent=31 // pred_check_branch
          %205 = sbr.rel (%p203) target = $region40
        $region39: #{tpu_custom_call.1} parent=31 // pred_region
          %206 = dma.done [#allocation7], 128
        $region40: #{tpu_custom_call.1} parent=31 // pred_fallthru
          _
        %s207 = sand.u32 %s30, 1
        %s208 = scalar_lea.sflag [#allocation4], %s207
        %s209 = sand.u32 %s30, 1
        %s210 = smul.addr %s209, 64
        %s211 = scalar_lea.vmem [#allocation3], %s210
        %p212 = pneg %p43
        %p213 = pneg %p40
        %p214 = pneg %p64
        %p215 = pneg %p61
        %p216 = pneg %p85
        %p217 = pneg %p82
        %p218 = pneg %p106
        %p219 = pneg %p103
        %p220 = pneg %p127
        %p221 = pneg %p124
        %s222 = smul.u32 8, %s22
        %s223 = ssub.s32 20, %s222
        %p224 = scmp.lt.s32.totalorder %s223, 8
        %s225 = scalar_select %p224, %s223, 8
        %s226 = smul.u32 128, %s225
        %p227 = scmp.eq.s32.totalorder %s22, 0
        // Predicated region
        $region41: #{tpu_custom_call.1} parent=31 // pred_check
          %p228 = pneg %p227
        $region42: #{tpu_custom_call.1} parent=31 // pred_check_branch
          %230 = sbr.rel (%p228) target = $region44
        $region43: #{tpu_custom_call.1} parent=31 // pred_region
          %231 = vst [vmem:[#allocation2] sm:$0x1] 0.0
        $region44: #{tpu_custom_call.1} parent=31 // pred_fallthru
          _
        %v232 = vld [vmem:[%s198] sm:$0xff]
        %v233 = vld [vmem:[%s198 + $0x8] sm:$0xff]
        %v234 = vld [vmem:[%s198 + $0x10] sm:$0xff]
        %v235 = vld [vmem:[%s198 + $0x18] sm:$0xff]
        %v236 = vld [vmem:[%s198 + $0x20] sm:$0xff]
        %v237 = vld [vmem:[%s198 + $0x28] sm:$0xff]
        %v238 = vld [vmem:[%s198 + $0x30] sm:$0xff]
        %v239 = vld [vmem:[%s198 + $0x38] sm:$0xff]
        %v240 = vld [vmem:[#allocation6] sm:$0xff]
        %v241 = vld [vmem:[%s2] sm:$0x1]
        %v242 = vmul.f32 %v232, %v240
        %v243 = vmul.f32 %v233, %v240
        %v244 = vmul.f32 %v234, %v240
        %v245 = vmul.f32 %v235, %v240
        %v246 = vmul.f32 %v236, %v240
        %v247 = vmul.f32 %v237, %v240
        %v248 = vmul.f32 %v238, %v240
        %v249 = vmul.f32 %v239, %v240
        %v250 = vrot.slane %v242, 4
        %v251 = vadd.f32 %v242, %v250
        %v252 = vrot.slane %v251, 2
        %v253 = vadd.f32 %v251, %v252
        %v254 = vrot.slane %v253, 1
        %v255 = vadd.f32 %v253, %v254
        %v256 = vrot.slane %v243, 4
        %v257 = vadd.f32 %v243, %v256
        %v258 = vrot.slane %v257, 2
        %v259 = vadd.f32 %v257, %v258
        %v260 = vrot.slane %v259, 1
        %v261 = vadd.f32 %v259, %v260
        %v262 = vrot.slane %v244, 4
        %v263 = vadd.f32 %v244, %v262
        %v264 = vrot.slane %v263, 2
        %v265 = vadd.f32 %v263, %v264
        %v266 = vrot.slane %v265, 1
        %v267 = vadd.f32 %v265, %v266
        %v268 = vrot.slane %v245, 4
        %v269 = vadd.f32 %v245, %v268
        %v270 = vrot.slane %v269, 2
        %v271 = vadd.f32 %v269, %v270
        %v272 = vrot.slane %v271, 1
        %v273 = vadd.f32 %v271, %v272
        %v274 = vrot.slane %v246, 4
        %v275 = vadd.f32 %v246, %v274
        %v276 = vrot.slane %v275, 2
        %v277 = vadd.f32 %v275, %v276
        %v278 = vrot.slane %v277, 1
        %v279 = vadd.f32 %v277, %v278
        %v280 = vrot.slane %v247, 4
        %v281 = vadd.f32 %v247, %v280
        %v282 = vrot.slane %v281, 2
        %v283 = vadd.f32 %v281, %v282
        %v284 = vrot.slane %v283, 1
        %v285 = vadd.f32 %v283, %v284
        %v286 = vrot.slane %v248, 4
        %v287 = vadd.f32 %v248, %v286
        %v288 = vrot.slane %v287, 2
        %v289 = vadd.f32 %v287, %v288
        %v290 = vrot.slane %v289, 1
        %v291 = vadd.f32 %v289, %v290
        %v292 = vrot.slane %v249, 4
        %v293 = vadd.f32 %v249, %v292
        %v294 = vrot.slane %v293, 2
        %v295 = vadd.f32 %v293, %v294
        %v296 = vrot.slane %v295, 1
        %v297 = vadd.f32 %v295, %v296
        %v298 = vmul.f32 %v232, %v232
        %v299 = vmul.f32 %v233, %v233
        %v300 = vmul.f32 %v234, %v234
        %v301 = vmul.f32 %v235, %v235
        %v302 = vmul.f32 %v236, %v236
        %v303 = vmul.f32 %v237, %v237
        %v304 = vmul.f32 %v238, %v238
        %v305 = vmul.f32 %v239, %v239
        %v306 = vrot.slane %v298, 4
        %v307 = vadd.f32 %v298, %v306
        %v308 = vrot.slane %v307, 2
        %v309 = vadd.f32 %v307, %v308
        %v310 = vrot.slane %v309, 1
        %v311 = vadd.f32 %v309, %v310
        %v312 = vrot.slane %v299, 4
        %v313 = vadd.f32 %v299, %v312
        %v314 = vrot.slane %v313, 2
        %v315 = vadd.f32 %v313, %v314
        %v316 = vrot.slane %v315, 1
        %v317 = vadd.f32 %v315, %v316
        %v318 = vrot.slane %v300, 4
        %v319 = vadd.f32 %v300, %v318
        %v320 = vrot.slane %v319, 2
        %v321 = vadd.f32 %v319, %v320
        %v322 = vrot.slane %v321, 1
        %v323 = vadd.f32 %v321, %v322
        %v324 = vrot.slane %v301, 4
        %v325 = vadd.f32 %v301, %v324
        %v326 = vrot.slane %v325, 2
        %v327 = vadd.f32 %v325, %v326
        %v328 = vrot.slane %v327, 1
        %v329 = vadd.f32 %v327, %v328
        %v330 = vrot.slane %v302, 4
        %v331 = vadd.f32 %v302, %v330
        %v332 = vrot.slane %v331, 2
        %v333 = vadd.f32 %v331, %v332
        %v334 = vrot.slane %v333, 1
        %v335 = vadd.f32 %v333, %v334
        %v336 = vrot.slane %v303, 4
        %v337 = vadd.f32 %v303, %v336
        %v338 = vrot.slane %v337, 2
        %v339 = vadd.f32 %v337, %v338
        %v340 = vrot.slane %v339, 1
        %v341 = vadd.f32 %v339, %v340
        %v342 = vrot.slane %v304, 4
        %v343 = vadd.f32 %v304, %v342
        %v344 = vrot.slane %v343, 2
        %v345 = vadd.f32 %v343, %v344
        %v346 = vrot.slane %v345, 1
        %v347 = vadd.f32 %v345, %v346
        %v348 = vrot.slane %v305, 4
        %v349 = vadd.f32 %v305, %v348
        %v350 = vrot.slane %v349, 2
        %v351 = vadd.f32 %v349, %v350
        %v352 = vrot.slane %v351, 1
        %v353 = vadd.f32 %v351, %v352
        %v354 = vmax.f32 %v311, 1e-16
        %v355 = vmax.f32 %v317, 1e-16
        %v356 = vmax.f32 %v323, 1e-16
        %v357 = vmax.f32 %v329, 1e-16
        %v358 = vmax.f32 %v335, 1e-16
        %v359 = vmax.f32 %v341, 1e-16
        %v360 = vmax.f32 %v347, 1e-16
        %v361 = vmax.f32 %v353, 1e-16
        %v362 = vrsqrt.pop %v354
        %v363 = vrsqrt.pop %v355
        %v364 = vrsqrt.pop %v356
        %v365 = vrsqrt.pop %v357
        %v366 = vrsqrt.pop %v358
        %v367 = vrsqrt.pop %v359
        %v368 = vrsqrt.pop %v360
        %v369 = vrsqrt.pop %v361
        %v370 = vmul.f32 %v255, %v362
        %v371 = vmul.f32 %v261, %v363
        %v372 = vmul.f32 %v267, %v364
        %v373 = vmul.f32 %v273, %v365
        %v374 = vmul.f32 %v279, %v366
        %v375 = vmul.f32 %v285, %v367
        %v376 = vmul.f32 %v291, %v368
        %v377 = vmul.f32 %v297, %v369
        %v379 = vlaneseq
        %v380 = vshrl.u32 %v379, 7
        %v381 = vsub.s32 0, %v380
        %v382 = vrot.slane %v241, %v381
        %v384 = vmul.f32 %v370, %v382
        %v385 = vmul.f32 %v371, %v382
        %v386 = vmul.f32 %v372, %v382
        %v387 = vmul.f32 %v373, %v382
        %v388 = vmul.f32 %v374, %v382
        %v389 = vmul.f32 %v375, %v382
        %v390 = vmul.f32 %v376, %v382
        %v391 = vmul.f32 %v377, %v382
        %s392 = smul.u32 %s22, 8
        %v393 = vlaneseq
        %v394 = vshrl.u32 %v393, 7
        %v395 = vstv %s392
        %v396 = vadd.s32 %v395, %v394
        %vm397 = vcmp.lt.s32.totalorder %v396, 20
        %v406 = vrot.slane %v385, 7
        %vm407 = vcmask 1041409
        %v408 = vsel %vm407, %v406, %v384
        %v409 = vrot.slane %v386, 6
        %vm410 = vcmask 1042434
        %v411 = vsel %vm410, %v409, %v408
        %v412 = vrot.slane %v387, 5
        %vm413 = vcmask 1043459
        %v414 = vsel %vm413, %v412, %v411
        %v415 = vrot.slane %v388, 4
        %vm416 = vcmask 1044484
        %v417 = vsel %vm416, %v415, %v414
        %v418 = vrot.slane %v389, 3
        %vm419 = vcmask 1045509
        %v420 = vsel %vm419, %v418, %v417
        %v421 = vrot.slane %v390, 2
        %vm422 = vcmask 1046534
        %v423 = vsel %vm422, %v421, %v420
        %v424 = vrot.slane %v391, 1
        %vm425 = vcmask 1047559
        %v426 = vsel %vm425, %v424, %v423
        %v428 = vsel %vm397, %v426, 0.0
        %v429 = vld [vmem:[#allocation2] sm:$0x1]
        %v430 = vrot.slane %v428, 4
        %v431 = vadd.f32 %v428, %v430
        %v432 = vrot.slane %v431, 2
        %v433 = vadd.f32 %v431, %v432
        %v434 = vrot.slane %v433, 1
        %v435 = vadd.f32 %v433, %v434
        %v436 = vadd.f32 %v429, %v435
        %437 = vst [vmem:[#allocation2] sm:$0x1] %v436
        %p438 = scmp.eq.s32.totalorder %s22, 2
        // Predicated region
        $region45: #{tpu_custom_call.1} parent=31 // pred_check
          %p439 = pneg %p438
        $region46: #{tpu_custom_call.1} parent=31 // pred_check_branch
          %441 = sbr.rel (%p439) target = $region48
        $region47: #{tpu_custom_call.1} parent=31 // pred_region
          %v442 = vld [vmem:[#allocation2] sm:$0x1]
          %vm443 = vcmask 1040384
          %v444 = vsel %vm443, %v442, 0.0
          %445 = vadd.xlane.f32.xlu0 %v444
          %v446 = vpop.xlane.xlu0 %445
          %v447 = vrot.slane %v446, 4
          %v448 = vadd.f32 %v446, %v447
          %v449 = vrot.slane %v448, 2
          %v450 = vadd.f32 %v448, %v449
          %v451 = vrot.slane %v450, 1
          %v452 = vadd.f32 %v450, %v451
          %s453 = vtos %v452
          %s454 = smul.f32 %s453, 0.000390625
          %s455 = ssub.f32 0.0, %s454
          %s456 = scalar_lea.smem [#allocation8], 0
          %457 = sst [smem:[%s456]] %s455
          %s458 = scalar_lea.smem [#allocation9], 0
          %459 = sst [smem:[%s458]] %s454
        $region48: #{tpu_custom_call.1} parent=31 // pred_fallthru
          _
        // Predicated region
        $region49: #{tpu_custom_call.1} parent=31 // pred_check
          %p460 = pneg %p103
        $region50: #{tpu_custom_call.1} parent=31 // pred_check_branch
          %462 = sbr.rel (%p460) target = $region52
        $region51: #{tpu_custom_call.1} parent=31 // pred_region
          %s464 = ssub.s32 16, 16
          %465 = vsyncadd [#allocation5], %s464
          %468 = dma.smem_to_hbm [#allocation8], 16, %s3, [#allocation5]
        $region52: #{tpu_custom_call.1} parent=31 // pred_fallthru
          _
        // Predicated region
        $region53: #{tpu_custom_call.1} parent=31 // pred_check
          %p469 = pneg %p124
        $region54: #{tpu_custom_call.1} parent=31 // pred_check_branch
          %471 = sbr.rel (%p469) target = $region56
        $region55: #{tpu_custom_call.1} parent=31 // pred_region
          %s473 = ssub.s32 16, 16
          %474 = vsyncadd [#allocation10], %s473
          %477 = dma.smem_to_hbm [#allocation9], 16, %s4, [#allocation10]
        $region56: #{tpu_custom_call.1} parent=31 // pred_fallthru
          _
        // Predicated region
        $region57: #{tpu_custom_call.1} parent=31 // pred_check
          %p478 = pneg %p103
        $region58: #{tpu_custom_call.1} parent=31 // pred_check_branch
          %480 = sbr.rel (%p478) target = $region60
        $region59: #{tpu_custom_call.1} parent=31 // pred_region
          %481 = dma.done [#allocation5], 16
        $region60: #{tpu_custom_call.1} parent=31 // pred_fallthru
          _
        // Predicated region
        $region61: #{tpu_custom_call.1} parent=31 // pred_check
          %p482 = pneg %p124
        $region62: #{tpu_custom_call.1} parent=31 // pred_check_branch
          %484 = sbr.rel (%p482) target = $region64
        $region63: #{tpu_custom_call.1} parent=31 // pred_region
          %485 = dma.done [#allocation10], 16
        $region64: #{tpu_custom_call.1} parent=31 // pred_fallthru
          _
        %486 = sfence
      $region32: #{tpu_custom_call.1} parent=5 // pred_fallthru
        _
      %p487 = scmp.le.s32.totalorder 2, %s17
      // Predicated region
      $region65: #{tpu_custom_call.1} parent=5 // pred_check
        %p488 = pneg %p487
      $region66: #{tpu_custom_call.1} parent=5 // pred_check_branch
        %490 = sbr.rel (%p488) target = $region68
      $region67: #{tpu_custom_call.1} parent=5 // pred_region
        %s491 = ssub.s32 %s17, 2
      $region68: #{tpu_custom_call.1} parent=5 // pred_fallthru
        _
    $region6: #{tpu_custom_call.1} parent=1 // loop_footer
      %s21 = sadd.s32 1, %s17
    $region7: #{tpu_custom_call.1} parent=1 // loop_footer_branch
      %16 = sbr.rel target = $region3
    $region8: #{tpu_custom_call.1} parent=1 // loop_exit
      _
    %492 = vsyncpa [#allocation4], 1
    %s493 = scalar_lea.sflag [#allocation4], 1
    %494 = vsyncpa %s493, 1
    %495 = vsyncpa [#allocation7], 1
    %496 = vsyncpa [#allocation5], 1
    %s497 = scalar_lea.sflag [#allocation5], 1
    %498 = vsyncpa %s497, 1
    %499 = vsyncpa [#allocation10], 1

</llo_original>
